<compile_context>
chip_gen: v5e
topology: v5e:2x2
jax: 0.10.0
libtpu: 0.0.40
codegen_flags: <defaults>
</compile_context>

<pallas_src>
import functools
import math

import jax
import jax.numpy as jnp
from jax import lax
from jax.experimental import pallas as pl
from jax.experimental.pallas import tpu as pltpu


# ----------------------------------------------------------------------------
# Tile-size helper: largest tile <= `preferred` that divides `dim` and is a
# multiple of `align`; falls back to the full dim (always a legal block).
# ----------------------------------------------------------------------------
def _pick_tile(dim, preferred, align):
    if dim <= preferred:
        return dim
    t = (preferred // align) * align
    while t >= align:
        if dim % t == 0:
            return t
        t -= align
    return dim


# ----------------------------------------------------------------------------
# Kernel 1: tiled linear layer  y = x @ w_t + b   (w_t is pre-transposed)
# ----------------------------------------------------------------------------
def _linear_kernel(x_ref, wt_ref, b_ref, o_ref, acc_ref):
    k = pl.program_id(2)

    @pl.when(k == 0)
    def _():
        acc_ref[...] = jnp.zeros_like(acc_ref)

    # bf16 x bf16 -> f32 accumulation on the MXU; no in-kernel transpose.
    acc_ref[...] += jnp.dot(x_ref[...], wt_ref[...],
                            preferred_element_type=jnp.float32)

    @pl.when(k == pl.num_programs(2) - 1)
    def _():
        o_ref[...] = (acc_ref[...] + b_ref[...].astype(jnp.float32)
                      ).astype(o_ref.dtype)


def linear(x, w_t, b, *, out_dtype, tm=512, tn=256, tk=512):
    """x: [M, K] (bf16), w_t: [K, N] (pre-transposed, bf16), b: [N] (f32)."""
    m, k_dim = x.shape
    n = w_t.shape[1]
    tm = _pick_tile(m, tm, 8)
    tn = _pick_tile(n, tn, 128)
    tk = _pick_tile(k_dim, tk, 128)
    grid = (m // tm, n // tn, k_dim // tk)

    flops = 2 * m * k_dim * n
    bytes_accessed = (x.size * x.dtype.itemsize
                      + w_t.size * w_t.dtype.itemsize
                      + b.size * 4
                      + m * n * jnp.dtype(out_dtype).itemsize)

    return pl.pallas_call(
        _linear_kernel,
        out_shape=jax.ShapeDtypeStruct((m, n), out_dtype),
        grid_spec=pltpu.PrefetchScalarGridSpec(
            num_scalar_prefetch=0,
            grid=grid,
            in_specs=[
                pl.BlockSpec((tm, tk), lambda i, j, kk: (i, kk)),
                pl.BlockSpec((tk, tn), lambda i, j, kk: (kk, j)),
                pl.BlockSpec((1, tn), lambda i, j, kk: (0, j)),
            ],
            out_specs=pl.BlockSpec((tm, tn), lambda i, j, kk: (i, j)),
            scratch_shapes=[pltpu.VMEM((tm, tn), jnp.float32)],
        ),
        compiler_params=pltpu.CompilerParams(
            dimension_semantics=("parallel", "parallel", "arbitrary")),
        cost_estimate=pl.CostEstimate(
            flops=flops, transcendentals=0, bytes_accessed=bytes_accessed),
    )(x, w_t, b.reshape(1, n).astype(jnp.float32))


# ----------------------------------------------------------------------------
# Kernel 2: flash-style scaled-dot-product attention (online softmax).
# Arrays are [B*H, S, d_k]; grid = (B*H, Sq/tq, Skv/tkv); KV axis is the
# (last, "arbitrary") reduction axis; (B*H, Sq) axes are parallel so both
# TensorCores of a v7x chip (and megacore generally) get work.
# ----------------------------------------------------------------------------
def _flash_attention_kernel(q_ref, k_ref, v_ref, o_ref,
                            m_sc, l_sc, acc_sc, *, scale):
    ki = pl.program_id(2)

    @pl.when(ki == 0)
    def _():
        m_sc[...] = jnp.full_like(m_sc, -jnp.inf)
        l_sc[...] = jnp.zeros_like(l_sc)
        acc_sc[...] = jnp.zeros_like(acc_sc)

    q = q_ref[...]                                    # (tq, d_k) bf16
    k = k_ref[...]                                    # (tkv, d_k) bf16
    # scores (tq, tkv) in f32 — contract on d_k without materializing k.T.
    s = lax.dot_general(q, k, (((1,), (1,)), ((), ())),
                        preferred_element_type=jnp.float32) * scale

    m_prev = m_sc[...]                                # (tq, 1) f32
    m_new = jnp.maximum(m_prev, jnp.max(s, axis=-1, keepdims=True))
    alpha = jnp.exp(m_prev - m_new)
    p = jnp.exp(s - m_new)                            # f32 softmax math (v5e-safe)
    l_sc[...] = alpha * l_sc[...] + jnp.sum(p, axis=-1, keepdims=True)
    acc_sc[...] = alpha * acc_sc[...] + jnp.dot(
        p.astype(v_ref.dtype), v_ref[...], preferred_element_type=jnp.float32)
    m_sc[...] = m_new

    @pl.when(ki == pl.num_programs(2) - 1)
    def _():
        inv_l = pl.reciprocal(l_sc[...], approx=True)     # EUP, not VALU divide
        o_ref[...] = (acc_sc[...] * inv_l).astype(o_ref.dtype)


def flash_attention(q, k, v, *, out_dtype, tq=256, tkv=512):
    """q: [BH, Sq, d_k], k/v: [BH, Skv, d_k] -> [BH, Sq, d_k]."""
    bh, s_q, d_k = q.shape
    s_kv = k.shape[1]
    tq = _pick_tile(s_q, tq, 8)
    tkv = _pick_tile(s_kv, tkv, 8)
    grid = (bh, s_q // tq, s_kv // tkv)
    scale = 1.0 / math.sqrt(d_k)

    flops = 4 * bh * s_q * s_kv * d_k
    bytes_accessed = ((q.size + k.size + v.size) * q.dtype.itemsize
                      + bh * s_q * d_k * jnp.dtype(out_dtype).itemsize)

    kernel = functools.partial(_flash_attention_kernel, scale=scale)
    return pl.pallas_call(
        kernel,
        out_shape=jax.ShapeDtypeStruct((bh, s_q, d_k), out_dtype),
        grid_spec=pltpu.PrefetchScalarGridSpec(
            num_scalar_prefetch=0,
            grid=grid,
            in_specs=[
                pl.BlockSpec((None, tq, d_k), lambda bh, qi, ki: (bh, qi, 0)),
                pl.BlockSpec((None, tkv, d_k), lambda bh, qi, ki: (bh, ki, 0)),
                pl.BlockSpec((None, tkv, d_k), lambda bh, qi, ki: (bh, ki, 0)),
            ],
            out_specs=pl.BlockSpec((None, tq, d_k),
                                   lambda bh, qi, ki: (bh, qi, 0)),
            scratch_shapes=[
                pltpu.VMEM((tq, 1), jnp.float32),     # running max m
                pltpu.VMEM((tq, 1), jnp.float32),     # running denom l
                pltpu.VMEM((tq, d_k), jnp.float32),   # output accumulator
            ],
        ),
        compiler_params=pltpu.CompilerParams(
            dimension_semantics=("parallel", "parallel", "arbitrary")),
        cost_estimate=pl.CostEstimate(
            flops=flops, transcendentals=bh * s_q * s_kv,
            bytes_accessed=bytes_accessed),
    )(q, k, v)


# ----------------------------------------------------------------------------
# MultiHeadAttention forward (wrapper around the two kernels)
# ----------------------------------------------------------------------------
def multi_head_attention(params, query, key, value, n_heads,
                         *, compute_dtype=jnp.bfloat16):
    """query/key/value: [B, S, d_model] (f32) -> [B, S, d_model] (f32)."""
    b, s_q, d_model = query.shape
    s_kv = key.shape[1]
    d_k = d_model // n_heads

    def to_heads(x2d, slen):
        # [B*slen, D] -> [B*H, slen, d_k]
        return (x2d.reshape(b, slen, n_heads, d_k)
                    .transpose(0, 2, 1, 3)
                    .reshape(b * n_heads, slen, d_k))

    # Weight transpose / concat / cast happen once per call here (outside the
    # kernels); under jit with constant params they are constant-folded.
    x_q = query.reshape(b * s_q, d_model).astype(compute_dtype)

    if key is query and value is query:
        # Self-attention: fused QKV projection — one kernel, x read once.
        wqkv_t = jnp.concatenate(
            [params["wq"], params["wk"], params["wv"]], axis=0
        ).T.astype(compute_dtype)
        bqkv = jnp.concatenate([params["bq"], params["bk"], params["bv"]])
        qkv = linear(x_q, wqkv_t, bqkv, out_dtype=compute_dtype)  # [B*S, 3D]
        q2, k2, v2 = jnp.split(qkv, 3, axis=-1)
        s_kv = s_q
    else:
        x_k = key.reshape(b * s_kv, d_model).astype(compute_dtype)
        x_v = value.reshape(b * s_kv, d_model).astype(compute_dtype)
        q2 = linear(x_q, params["wq"].T.astype(compute_dtype), params["bq"],
                    out_dtype=compute_dtype)
        k2 = linear(x_k, params["wk"].T.astype(compute_dtype), params["bk"],
                    out_dtype=compute_dtype)
        v2 = linear(x_v, params["wv"].T.astype(compute_dtype), params["bv"],
                    out_dtype=compute_dtype)

    # TODO(synk): the head split/merge transposes below are plain XLA ops on
    # bf16 activations; for d_k that is a multiple of 128 they could be folded
    # into the attention BlockSpecs for fully lane-dense [S, H*d_k] tiles.
    qh = to_heads(q2, s_q)
    kh = to_heads(k2, s_kv)
    vh = to_heads(v2, s_kv)

    attn = flash_attention(qh, kh, vh, out_dtype=compute_dtype)  # [B*H, Sq, d_k]
    attn = (attn.reshape(b, n_heads, s_q, d_k)
                .transpose(0, 2, 1, 3)
                .reshape(b * s_q, d_model))

    out = linear(attn, params["wo"].T.astype(compute_dtype), params["bo"],
                 out_dtype=jnp.float32)
    return out.reshape(b, s_q, d_model)


# ----------------------------------------------------------------------------
# Deterministic parameter init (PyTorch nn.Linear-style uniform bounds)
# ----------------------------------------------------------------------------
def init_params(key, d_model):
    names = ["q", "k", "v", "o"]
    keys = jax.random.split(key, 2 * len(names))
    bound = 1.0 / (d_model ** 0.5)
    params = {}
    for i, n in enumerate(names):
        params[f"w{n}"] = jax.random.uniform(
            keys[2 * i], (d_model, d_model), jnp.float32, -bound, bound)
        params[f"b{n}"] = jax.random.uniform(
            keys[2 * i + 1], (d_model,), jnp.float32, -bound, bound)
    return params


# ----------------------------------------------------------------------------
# Reference in plain JAX f32 (mirrors the PyTorch module) for a sanity check
# ----------------------------------------------------------------------------
def reference_mha(params, query, key, value, n_heads):
    b, s_q, d_model = query.shape
    d_k = d_model // n_heads

    def proj(x, w, bias):
        y = x @ w.T + bias
        return y.reshape(b, -1, n_heads, d_k).transpose(0, 2, 1, 3)

    q = proj(query, params["wq"], params["bq"])
    k = proj(key, params["wk"], params["bk"])
    v = proj(value, params["wv"], params["bv"])
    scores = jnp.einsum("bhqd,bhkd->bhqk", q, k) / jnp.sqrt(d_k)
    attn = jax.nn.softmax(scores, axis=-1)
    out = jnp.einsum("bhqk,bhkd->bhqd", attn, v)
    out = out.transpose(0, 2, 1, 3).reshape(b, s_q, d_model)
    return out @ params["wo"].T + params["bo"]


if __name__ == "__main__":
    B, S, D_MODEL, N_HEADS = 2, 8, 32, 4

    root = jax.random.PRNGKey(0)
    k_params, k_q, k_k, k_v = jax.random.split(root, 4)

    params = init_params(k_params, D_MODEL)
    x = jax.random.normal(k_q, (B, S, D_MODEL), jnp.float32)

    # Self-attention (query is key is value) -> fused-QKV path.
    out = multi_head_attention(params, x, x, x, N_HEADS)
    out = jax.block_until_ready(out)
    ref = reference_mha(params, x, x, x, N_HEADS)
    assert out.shape == (B, S, D_MODEL)
    # bf16 matmuls with f32 accumulation: compare against the f32 reference
    # with a bf16-appropriate tolerance.
    assert jnp.allclose(out, ref, atol=2e-2, rtol=2e-2), \
        f"self-attn mismatch, max abs err {jnp.max(jnp.abs(out - ref))}"

    # Cross-attention (distinct key/value) -> separate-projection path.
    key_in = jax.random.normal(k_k, (B, S, D_MODEL), jnp.float32)
    value_in = jax.random.normal(k_v, (B, S, D_MODEL), jnp.float32)
    out2 = multi_head_attention(params, x, key_in, value_in, N_HEADS)
    out2 = jax.block_until_ready(out2)
    ref2 = reference_mha(params, x, key_in, value_in, N_HEADS)
    assert jnp.allclose(out2, ref2, atol=2e-2, rtol=2e-2), \
        f"cross-attn mismatch, max abs err {jnp.max(jnp.abs(out2 - ref2))}"

    print("KERNEL_OK")
</pallas_src>

<mosaic_0001>
module attributes {stable_mosaic.version = 11 : i64} {
  func.func @_linear_kernel(%arg0: i32, %arg1: i32, %arg2: i32, %arg3: memref<16x32xbf16, #tpu.memory_space<vmem>>, %arg4: memref<32x96xbf16, #tpu.memory_space<vmem>>, %arg5: memref<1x96xf32, #tpu.memory_space<vmem>>, %arg6: memref<16x96xbf16, #tpu.memory_space<vmem>>, %arg7: memref<16x96xf32, #tpu.memory_space<vmem>>) attributes {dimension_semantics = [#tpu.dimension_semantics<parallel>, #tpu.dimension_semantics<parallel>, #tpu.dimension_semantics<arbitrary>], iteration_bounds = array<i64: 1, 1, 1>, scalar_prefetch = 0 : i64, scratch_operands = 1 : i64, tpu.core_type = #tpu.core_type<tc>, window_params = [{transform_indices = @transform_0, window_bounds = array<i64: 16, 32>}, {transform_indices = @transform_1, window_bounds = array<i64: 32, 96>}, {transform_indices = @transform_2, window_bounds = array<i64: 1, 96>}, {transform_indices = @transform_3, window_bounds = array<i64: 16, 96>}]} {
    %c0_i32 = arith.constant 0 : i32
    %0 = arith.cmpi eq, %arg2, %c0_i32 : i32
    %1 = arith.extui %0 : i1 to i32
    %c0_i32_0 = arith.constant 0 : i32
    %2 = arith.cmpi ne, %1, %c0_i32_0 : i32
    scf.if %2 {
      %cst_10 = arith.constant 0.000000e+00 : f32
      %12 = vector.broadcast %cst_10 : f32 to vector<16x96xf32>
      %c0_11 = arith.constant 0 : index
      %c0_12 = arith.constant 0 : index
      %13 = vector.load %arg7[%c0_11, %c0_12] : memref<16x96xf32, #tpu.memory_space<vmem>>, vector<16x96xf32>
      tpu.vector_store %arg7[%c0_11, %c0_12], %12 {strides = array<i32>} : memref<16x96xf32, #tpu.memory_space<vmem>>, vector<16x96xf32>,
    } else {
    }
    %c0 = arith.constant 0 : index
    %c0_1 = arith.constant 0 : index
    %3 = vector.load %arg7[%c0, %c0_1] : memref<16x96xf32, #tpu.memory_space<vmem>>, vector<16x96xf32>
    %c0_2 = arith.constant 0 : index
    %c0_3 = arith.constant 0 : index
    %4 = vector.load %arg3[%c0_2, %c0_3] : memref<16x32xbf16, #tpu.memory_space<vmem>>, vector<16x32xbf16>
    %c0_4 = arith.constant 0 : index
    %c0_5 = arith.constant 0 : index
    %5 = vector.load %arg4[%c0_4, %c0_5] : memref<32x96xbf16, #tpu.memory_space<vmem>>, vector<32x96xbf16>
    %cst = arith.constant dense<0.000000e+00> : vector<16x96xf32>
    %6 = tpu.matmul %4, %5, %cst {dimension_numbers = #tpu.dot_dimension_numbers<[1], [0], [0], [1], [0, 0, 1, 1], [], []>} : vector<16x32xbf16>, vector<32x96xbf16>, vector<16x96xf32> -> vector<16x96xf32>
    %7 = arith.addf %3, %6 : vector<16x96xf32>
    %c0_6 = arith.constant 0 : index
    %c0_7 = arith.constant 0 : index
    %8 = vector.load %arg7[%c0_6, %c0_7] : memref<16x96xf32, #tpu.memory_space<vmem>>, vector<16x96xf32>
    tpu.vector_store %arg7[%c0_6, %c0_7], %7 {strides = array<i32>} : memref<16x96xf32, #tpu.memory_space<vmem>>, vector<16x96xf32>,
    %c0_i32_8 = arith.constant 0 : i32
    %9 = arith.cmpi eq, %arg2, %c0_i32_8 : i32
    %10 = arith.extui %9 : i1 to i32
    %c0_i32_9 = arith.constant 0 : i32
    %11 = arith.cmpi ne, %10, %c0_i32_9 : i32
    scf.if %11 {
      %c0_10 = arith.constant 0 : index
      %c0_11 = arith.constant 0 : index
      %12 = vector.load %arg7[%c0_10, %c0_11] : memref<16x96xf32, #tpu.memory_space<vmem>>, vector<16x96xf32>
      %c0_12 = arith.constant 0 : index
      %c0_13 = arith.constant 0 : index
      %13 = vector.load %arg5[%c0_12, %c0_13] : memref<1x96xf32, #tpu.memory_space<vmem>>, vector<1x96xf32>
      %14 = vector.broadcast %13 : vector<1x96xf32> to vector<16x96xf32>
      %15 = arith.addf %12, %14 : vector<16x96xf32>
      %16 = arith.truncf %15 : vector<16x96xf32> to vector<16x96xbf16>
      %c0_14 = arith.constant 0 : index
      %c0_15 = arith.constant 0 : index
      %17 = vector.load %arg6[%c0_14, %c0_15] : memref<16x96xbf16, #tpu.memory_space<vmem>>, vector<16x96xbf16>
      tpu.vector_store %arg6[%c0_14, %c0_15], %16 {strides = array<i32>} : memref<16x96xbf16, #tpu.memory_space<vmem>>, vector<16x96xbf16>,
    } else {
    }
    return
  }
  func.func @transform_0(%arg0: i32, %arg1: i32, %arg2: i32) -> (i32, i32) {
    %c0_i32 = arith.constant 0 : i32
    return %arg0, %arg2 : i32, i32
  }
  func.func @transform_1(%arg0: i32, %arg1: i32, %arg2: i32) -> (i32, i32) {
    %c0_i32 = arith.constant 0 : i32
    return %arg2, %arg1 : i32, i32
  }
  func.func @transform_2(%arg0: i32, %arg1: i32, %arg2: i32) -> (i32, i32) {
    %c0_i32 = arith.constant 0 : i32
    %c0_i32_0 = arith.constant 0 : i32
    return %c0_i32, %arg1 : i32, i32
  }
  func.func @transform_3(%arg0: i32, %arg1: i32, %arg2: i32) -> (i32, i32) {
    %c0_i32 = arith.constant 0 : i32
    return %arg0, %arg1 : i32, i32
  }
}

</mosaic_0001>

<llo_original>
// kernel: tpu_custom_call.1
$region0: #{tpu_custom_call.1}
  #allocation0 [shape = 'u32[]', space=smem, size = 0x4, offset = 0x4, fixed_abs, tag = 'smem constant byte address 0x4 - core index']
  #allocation1 [shape = 'u32[72,128]{1,0:T(1,128)}', space=vmem, size = 0x9000, scoped, tag = 'internal scratch']
  #allocation2 [shape = 'f32[16,96]{1,0:T(8,128)}', space=vmem, size = 0x2000, scoped, tag = 'scratch operand']
  %s0 = inlined_call_operand.hbm [shape: bf16[16,32], index: 0, kind: input, shape index: {}]
  %s1 = inlined_call_operand.hbm [shape: bf16[32,96], index: 1, kind: input, shape index: {}]
  %s2 = inlined_call_operand.vmem [shape: f32[1,96], index: 2, kind: input, shape index: {}]
  %s3 = inlined_call_operand.hbm [shape: bf16[16,96], index: 3, kind: output, shape index: {}]
  %s4 = sld [smem:[#allocation0]]
  $region38: #{tpu_custom_call.1} parent=0
    _
  %s6 = ssub.s32 1, %s4
  %s7 = scalar_select 0, %s6, %s4
  $region1: #{tpu_custom_call.1} parent=0
    #allocation3 [shape = 'u8[4096]{0}', space=vmem, size = 0x1000, scoped, tag = 'input window, operand 0, single buffered']
    #allocation4 [shape = 's32[1]{0}', space=sflag, size = 0x4, scoped, tag = 'scoped memory for tpu_custom_call.1']
    #allocation5 [shape = 's32[1]{0}', space=sflag, size = 0x4, scoped, tag = 'scoped memory for tpu_custom_call.1']
    #allocation6 [shape = 'u8[8192]{0}', space=vmem, size = 0x2000, scoped, tag = 'input window, operand 1, single buffered']
    #allocation7 [shape = 's32[1]{0}', space=sflag, size = 0x4, scoped, tag = 'scoped memory for tpu_custom_call.1']
    #allocation8 [shape = 'u8[4096]{0}', space=vmem, size = 0x1000, scoped, tag = 'output window, operand 0, single buffered']
    %8 = vsyncpa [#allocation4], 0
    %9 = vsyncpa [#allocation7], 0
    %10 = vsyncpa [#allocation5], 0
    // Predicated region
    $region2: #{tpu_custom_call.1} parent=1 // pred_check
      _
    $region3: #{tpu_custom_call.1} parent=1 // pred_check_branch
      %12 = sbr.rel (0) target = $region5
    $region4: #{tpu_custom_call.1} parent=1 // pred_region
      %14 = vsyncadd [#allocation4], 0
      %s15 = sshll.u32 %s0, 4
      %s16 = int_to_ptr.hbm [resolvable:$true] %s15
      %s17 = sshll.u32 [#allocation3], 4
      %s18 = int_to_ptr.vmem [resolvable:$true] %s17
      %23 = dma.hbm_to_vmem [thread:$0]  %s16, 128, %s18, [#allocation4], 64, 64, 4
    $region5: #{tpu_custom_call.1} parent=1 // pred_fallthru
      _
    // Predicated region
    $region6: #{tpu_custom_call.1} parent=1 // pred_check
      _
    $region7: #{tpu_custom_call.1} parent=1 // pred_check_branch
      %25 = sbr.rel (0) target = $region9
    $region8: #{tpu_custom_call.1} parent=1 // pred_region
      %27 = vsyncadd [#allocation7], 0
      %s28 = sshll.u32 %s1, 4
      %s29 = int_to_ptr.hbm [resolvable:$true] %s28
      %s30 = sshll.u32 [#allocation6], 4
      %s31 = int_to_ptr.vmem [resolvable:$true] %s30
      %36 = dma.hbm_to_vmem [thread:$0]  %s29, 256, %s31, [#allocation7], 64, 64, 4
    $region9: #{tpu_custom_call.1} parent=1 // pred_fallthru
      _
    // Predicated region
    $region10: #{tpu_custom_call.1} parent=1 // pred_check
      _
    $region11: #{tpu_custom_call.1} parent=1 // pred_check_branch
      %38 = sbr.rel (0) target = $region13
    $region12: #{tpu_custom_call.1} parent=1 // pred_region
      _
    $region13: #{tpu_custom_call.1} parent=1 // pred_fallthru
      _
    // Predicated region
    $region14: #{tpu_custom_call.1} parent=1 // pred_check
      _
    $region15: #{tpu_custom_call.1} parent=1 // pred_check_branch
      %40 = sbr.rel (0) target = $region17
    $region16: #{tpu_custom_call.1} parent=1 // pred_region
      %42 = dma.done [#allocation4], 128
    $region17: #{tpu_custom_call.1} parent=1 // pred_fallthru
      _
    // Predicated region
    $region18: #{tpu_custom_call.1} parent=1 // pred_check
      _
    $region19: #{tpu_custom_call.1} parent=1 // pred_check_branch
      %44 = sbr.rel (0) target = $region21
    $region20: #{tpu_custom_call.1} parent=1 // pred_region
      %46 = dma.done [#allocation7], 256
    $region21: #{tpu_custom_call.1} parent=1 // pred_fallthru
      _
    %p48 = scmp.eq.s32.totalorder 0, 0
    // Predicated region
    $region22: #{tpu_custom_call.1} parent=1 // pred_check
      %p49 = pneg %p48
    $region23: #{tpu_custom_call.1} parent=1 // pred_check_branch
      %51 = sbr.rel (%p49) target = $region25
    $region24: #{tpu_custom_call.1} parent=1 // pred_region
      %vm52 = vcmask 785408
      %53 = vst.msk [vmem:[#allocation2] sm:$0xff] %vm52, 0.0
      %54 = vst.msk [vmem:[#allocation2 + $0x8] sm:$0xff] %vm52, 0.0
    $region25: #{tpu_custom_call.1} parent=1 // pred_fallthru
      _
    %v55 = vld [vmem:[#allocation2] sm:$0xff]
    %v56 = vld [vmem:[#allocation2 + $0x8] sm:$0xff]
    %v57 = vld [vmem:[#allocation3] sm:$0xf]
    %v58 = vld [vmem:[#allocation3 + $0x4] sm:$0xf]
    %v59 = vld [vmem:[#allocation6] sm:$0xf]
    %v60 = vld [vmem:[#allocation6 + $0x4] sm:$0xf]
    %v61 = vld [vmem:[#allocation6 + $0x8] sm:$0xf]
    %v62 = vld [vmem:[#allocation6 + $0xc] sm:$0xf]
    %v65 = vunpack.c.l.b16 %v57
    %v66 = vunpack.c.l.b16 %v58
    %v67 = vpack.c.b16 %v66, %v65
    %v72 = vunpack.c.l.b16 %v59
    %v73 = vunpack.c.l.b16 %v60
    %v74 = vunpack.c.l.b16 %v61
    %v75 = vunpack.c.l.b16 %v62
    %v76 = vpack.c.b16 %v73, %v72
    %v77 = vpack.c.b16 %v75, %v74
    %vm80 = vcmask 261120
    %v82 = vsel %vm80, %v67, 0
    %84 = vmatpush.bf16.msra.mxu0 0
    %85 = vmatpush.bf16.msra.mxu0 0
    %86 = vmatpush.bf16.msra.mxu0 0
    %87 = vmatpush.bf16.msra.mxu0 0
    %88 = vmatpush.bf16.msra.mxu0 0
    %89 = vmatpush.bf16.msra.mxu0 0
    %90 = vmatpush.bf16.msra.mxu0 %v77
    %91 = vmatpush.bf16.msra.mxu0 %v76
    %92 = vmatmul.bf16.gmra.mxu0 %v82
    %v93 = vpop.f32.mrf.mxu0
    %v94 = vadd.f32 0.0, %v93
    %v95 = vpop.f32.mrf.mxu0
    %v96 = vadd.f32 0.0, %v95
    %97 = vdwg.mxu0
    %v98 = vadd.f32 %v55, %v94
    %v99 = vadd.f32 %v56, %v96
    %vm100 = vcmask 785408
    %101 = vst.msk [vmem:[#allocation2] sm:$0xff] %vm100, %v98
    %102 = vst.msk [vmem:[#allocation2 + $0x8] sm:$0xff] %vm100, %v99
    // Predicated region
    $region26: #{tpu_custom_call.1} parent=1 // pred_check
      %p103 = pneg %p48
    $region27: #{tpu_custom_call.1} parent=1 // pred_check_branch
      %105 = sbr.rel (%p103) target = $region29
    $region28: #{tpu_custom_call.1} parent=1 // pred_region
      %v106 = vld [vmem:[#allocation2] sm:$0xff]
      %v107 = vld [vmem:[#allocation2 + $0x8] sm:$0xff]
      %v108 = vld [vmem:[%s2] sm:$0x1]
      %v110 = vperm.slane %v108, 0
      %v112 = vadd.f32 %v106, %v110
      %v113 = vadd.f32 %v107, %v110
      %v114 = vpack.c.bf16 %v112, %v112
      %v115 = vpack.c.bf16 %v113, %v113
      %vm116 = vcmask 781312
      %117 = vst.msk [vmem:[#allocation8] sm:$0xf] %vm116, %v114
      %118 = vst.msk [vmem:[#allocation8 + $0x4] sm:$0xf] %vm116, %v115
    $region29: #{tpu_custom_call.1} parent=1 // pred_fallthru
      _
    // Predicated region
    $region30: #{tpu_custom_call.1} parent=1 // pred_check
      _
    $region31: #{tpu_custom_call.1} parent=1 // pred_check_branch
      %120 = sbr.rel (0) target = $region33
    $region32: #{tpu_custom_call.1} parent=1 // pred_region
      %122 = vsyncadd [#allocation5], 0
      %s123 = sshll.u32 [#allocation8], 4
      %s124 = int_to_ptr.vmem [resolvable:$true] %s123
      %s125 = sshll.u32 %s3, 4
      %s126 = int_to_ptr.hbm [resolvable:$true] %s125
      %131 = dma.vmem_to_hbm [thread:$0]  %s124, 128, %s126, [#allocation5], 64, 64, 4
    $region33: #{tpu_custom_call.1} parent=1 // pred_fallthru
      _
    // Predicated region
    $region34: #{tpu_custom_call.1} parent=1 // pred_check
      _
    $region35: #{tpu_custom_call.1} parent=1 // pred_check_branch
      %133 = sbr.rel (0) target = $region37
    $region36: #{tpu_custom_call.1} parent=1 // pred_region
      %135 = dma.done [#allocation5], 128
    $region37: #{tpu_custom_call.1} parent=1 // pred_fallthru
      _
    %136 = vsyncpa [#allocation4], 1
    %137 = vsyncpa [#allocation7], 1
    %138 = vsyncpa [#allocation5], 1

</llo_original>
